<compile_context>
chip_gen: v7x
topology: tpu7x:2x2x1
jax: 0.10.0
libtpu: 0.0.40
codegen_flags: <defaults>
</compile_context>

<pallas_src>
import jax
import jax.numpy as jnp
from jax.experimental import pallas as pl
from jax.experimental.pallas import tpu as pltpu

INSERT_CLS_TOKEN = True
INSERT_DIST_TOKEN = True
NUM_HEAD_TOKENS = int(INSERT_CLS_TOKEN) + int(INSERT_DIST_TOKEN)


def avg_agg_kernel(w_ref, x_ref, o_ref):
    """One grid step = TB batch rows.

    w_ref: (TB, 1, L) float32  per-row weights: 0 for head / padded tokens,
                               1/count for kept body tokens.
    x_ref: (TB, L, D)          native storage dtype (f32 / bf16 / ...).
    o_ref: (TB, D) or (TB, 1, D)
    """
    # Single batched MXU matmul: masked sum and the 1/count scale in one op.
    out = jnp.einsum(
        "bql,bld->bqd",
        w_ref[...],
        x_ref[...],
        preferred_element_type=jnp.float32,
    )  # (TB, 1, D) f32
    o_ref[...] = out.reshape(o_ref.shape).astype(o_ref.dtype)


def _round_up(n, m):
    return ((n + m - 1) // m) * m


def _vmem_capacity_bytes():
    try:
        return int(pltpu.get_tpu_info().vmem_capacity_bytes)
    except Exception:
        return 64 * 1024 * 1024  # conservative default (v7x per-core VMEM)


def _choose_tile_b(B, L, D, x_itemsize, vmem_cap):
    """Batch rows per grid step: big DMAs, dense output stores, double-buffer fits."""
    # Per-batch-row VMEM footprint: x row + weight row + output row.
    row_bytes = L * D * x_itemsize + L * 4 + D * max(x_itemsize, 4)
    per_buffer_budget = int(0.30 * vmem_cap)  # blocks are double-buffered
    tb = max(1, per_buffer_budget // max(row_bytes, 1))
    if tb >= 8:
        tb = (tb // 8) * 8  # multiple of 8 -> unmasked, sublane-dense output stores
        tb = min(tb, _round_up(B, 8), 512)
    else:
        # Very large L*D rows: fall back to a small TB.
        # TODO(synk): for extreme L*D on v7x (64 MiB VMEM), also tile the length
        # axis with an "arbitrary" reduction grid dim + VMEM f32 accumulator.
        tb = min(tb, B)
    return int(tb), row_bytes


def average_aggregator(x, padding_mask=None):
    """JAX wrapper mirroring AverageAggregator.forward.

    x:            (B, L, D)
    padding_mask: (B, L - NUM_HEAD_TOKENS) bool or None (True = padded)
    returns:      (B, D), dtype of x
    """
    B, L, D = x.shape
    Lp = L - NUM_HEAD_TOKENS

    if padding_mask is None:
        keep_body = jnp.ones((B, Lp), dtype=jnp.float32)
    else:
        keep_body = jnp.logical_not(padding_mask).astype(jnp.float32)

    # Fold the masked-mean normalization into the weights so the kernel is a
    # single matmul per row. NOTE: a fully-padded row (count == 0) yields NaN,
    # matching the PyTorch module's 0/0 behavior.
    count = jnp.sum(keep_body, axis=-1, keepdims=True)  # (B, 1)
    weights = jnp.concatenate(
        [jnp.zeros((B, NUM_HEAD_TOKENS), jnp.float32), keep_body / count],
        axis=-1,
    )  # (B, L), lane-dense rows

    vmem_cap = _vmem_capacity_bytes()
    TB, row_bytes = _choose_tile_b(B, L, D, x.dtype.itemsize, vmem_cap)
    B_pad = _round_up(B, TB)
    if B_pad != B:
        # Zero-padded rows have zero weights -> they contribute nothing and the
        # extra output rows are sliced off below.
        x = jnp.pad(x, ((0, B_pad - B), (0, 0), (0, 0)))
        weights = jnp.pad(weights, ((0, B_pad - B), (0, 0)))
    w = weights.reshape(B_pad, 1, L)

    # Scoped VMEM must cover the double-buffered blocks (with headroom) but stay
    # within what the device physically has.
    block_bytes = TB * row_bytes
    vmem_limit = max(int(2.5 * block_bytes) + (2 << 20), 32 << 20)
    vmem_limit = min(vmem_limit, int(0.85 * vmem_cap))

    dense_out = (TB % 8 == 0) or (TB == B_pad)
    if dense_out:
        out_shape = jax.ShapeDtypeStruct((B_pad, D), x.dtype)
        out_spec = pl.BlockSpec((TB, D), lambda b: (b, 0))
    else:
        # TB not sublane-aligned: keep the trailing block dims equal to the full
        # array dims so the BlockSpec stays legal.
        out_shape = jax.ShapeDtypeStruct((B_pad, 1, D), x.dtype)
        out_spec = pl.BlockSpec((TB, 1, D), lambda b: (b, 0, 0))

    out = pl.pallas_call(
        avg_agg_kernel,
        out_shape=out_shape,
        grid_spec=pltpu.PrefetchScalarGridSpec(
            num_scalar_prefetch=0,
            grid=(B_pad // TB,),
            in_specs=[
                pl.BlockSpec((TB, 1, L), lambda b: (b, 0, 0)),
                pl.BlockSpec((TB, L, D), lambda b: (b, 0, 0)),
            ],
            out_specs=out_spec,
        ),
        compiler_params=pltpu.CompilerParams(
            # Batch rows are independent -> shard across TensorCores where present.
            dimension_semantics=("parallel",),
            vmem_limit_bytes=vmem_limit,
        ),
    )(w, x)

    return out.reshape(B_pad, D)[:B]


def _reference(x, padding_mask=None):
    """Pure-JAX reference replicating the PyTorch forward exactly."""
    x_body = x[:, NUM_HEAD_TOKENS:, :]
    B, Lp, _ = x_body.shape
    if padding_mask is None:
        padding_mask = jnp.zeros((B, Lp), dtype=bool)
    x_body = jnp.where(padding_mask[:, :, None], 0.0, x_body)
    nonpad = jnp.logical_not(padding_mask).astype(jnp.int32)
    return x_body.sum(axis=-2) / nonpad.sum(axis=-1, keepdims=True)


if __name__ == "__main__":
    key = jax.random.PRNGKey(0)
    B, L, D = 2, 10, 32  # L = 2 head tokens (cls + dist) + 8 body tokens
    x = jax.random.normal(key, (B, L, D), dtype=jnp.float32)

    # Case 1: padding_mask=None (module default path).
    out_none = jax.block_until_ready(average_aggregator(x))
    ref_none = _reference(x)
    assert out_none.shape == (B, D)
    assert jnp.allclose(out_none, ref_none, atol=1e-5, rtol=1e-5)

    # Case 2: explicit padding mask (pad last 3 tokens of batch 1).
    pad = jnp.zeros((B, L - NUM_HEAD_TOKENS), dtype=bool)
    pad = pad.at[1, -3:].set(True)
    out_pad = jax.block_until_ready(average_aggregator(x, pad))
    ref_pad = _reference(x, pad)
    assert out_pad.shape == (B, D)
    assert jnp.allclose(out_pad, ref_pad, atol=1e-5, rtol=1e-5)

    print("KERNEL_OK")
</pallas_src>

<mosaic_0001>
module attributes {stable_mosaic.version = 11 : i64} {
  func.func @avg_agg_kernel(%arg0: i32, %arg1: memref<8x1x10xf32, #tpu.memory_space<vmem>>, %arg2: memref<8x10x32xf32, #tpu.memory_space<vmem>>, %arg3: memref<8x32xf32, #tpu.memory_space<vmem>>) attributes {dimension_semantics = [#tpu.dimension_semantics<parallel>], iteration_bounds = array<i64: 1>, scalar_prefetch = 0 : i64, scratch_operands = 0 : i64, tpu.core_type = #tpu.core_type<tc>, window_params = [{transform_indices = @transform_0, window_bounds = array<i64: 8, 1, 10>}, {transform_indices = @transform_1, window_bounds = array<i64: 8, 10, 32>}, {transform_indices = @transform_2, window_bounds = array<i64: 8, 32>}]} {
    %c0 = arith.constant 0 : index
    %c0_0 = arith.constant 0 : index
    %c0_1 = arith.constant 0 : index
    %0 = vector.load %arg1[%c0, %c0_0, %c0_1] : memref<8x1x10xf32, #tpu.memory_space<vmem>>, vector<8x1x10xf32>
    %c0_2 = arith.constant 0 : index
    %c0_3 = arith.constant 0 : index
    %c0_4 = arith.constant 0 : index
    %1 = vector.load %arg2[%c0_2, %c0_3, %c0_4] : memref<8x10x32xf32, #tpu.memory_space<vmem>>, vector<8x10x32xf32>
    "tpu.trace_start"() <{level = 10 : i32, message = "bql,bld->bqd"}> : () -> ()
    %cst = arith.constant dense<0.000000e+00> : vector<8x1x32xf32>
    %2 = tpu.matmul %0, %1, %cst {dimension_numbers = #tpu.dot_dimension_numbers<[2], [1], [1], [2], [0, 0, 0, 1, 1, 2], [0], [0]>} : vector<8x1x10xf32>, vector<8x10x32xf32>, vector<8x1x32xf32> -> vector<8x1x32xf32>
    "tpu.trace_stop"() : () -> ()
    %3 = vector.shape_cast %2 : vector<8x1x32xf32> to vector<8x32xf32>
    %c0_5 = arith.constant 0 : index
    %c0_6 = arith.constant 0 : index
    %4 = vector.load %arg3[%c0_5, %c0_6] : memref<8x32xf32, #tpu.memory_space<vmem>>, vector<8x32xf32>
    tpu.vector_store %arg3[%c0_5, %c0_6], %3 {strides = array<i32>} : memref<8x32xf32, #tpu.memory_space<vmem>>, vector<8x32xf32>,
    return
  }
  func.func @transform_0(%arg0: i32) -> (i32, i32, i32) {
    %c0_i32 = arith.constant 0 : i32
    %c0_i32_0 = arith.constant 0 : i32
    %c0_i32_1 = arith.constant 0 : i32
    return %arg0, %c0_i32, %c0_i32_0 : i32, i32, i32
  }
  func.func @transform_1(%arg0: i32) -> (i32, i32, i32) {
    %c0_i32 = arith.constant 0 : i32
    %c0_i32_0 = arith.constant 0 : i32
    %c0_i32_1 = arith.constant 0 : i32
    return %arg0, %c0_i32, %c0_i32_0 : i32, i32, i32
  }
  func.func @transform_2(%arg0: i32) -> (i32, i32) {
    %c0_i32 = arith.constant 0 : i32
    %c0_i32_0 = arith.constant 0 : i32
    return %arg0, %c0_i32 : i32, i32
  }
}

</mosaic_0001>

<llo_original>
// kernel: tpu_custom_call.1
$region0: #{tpu_custom_call.1}
  #allocation0 [shape = 'u32[]', space=smem, size = 0x4, offset = 0x4, fixed_abs, tag = 'smem constant byte address 0x4 - core index']
  #allocation1 [shape = 'u32[144,128]{1,0:T(1,128)}', space=vmem, size = 0x12000, scoped, tag = 'internal scratch']
  %s0 = inlined_call_operand.vmem [shape: f32[8,1,10], index: 0, kind: input, shape index: {}]
  %s1 = inlined_call_operand.vmem [shape: f32[8,10,32], index: 1, kind: input, shape index: {}]
  %s2 = inlined_call_operand.hbm [shape: f32[8,32], index: 2, kind: output, shape index: {}]
  %s3 = sld [smem:[#allocation0]]
  $region18: #{tpu_custom_call.1} parent=0
    _
  %s5 = ssub.s32 1, %s3
  %s6 = scalar_select 0, %s5, %s3
  $region1: #{tpu_custom_call.1} parent=0
    #allocation2 [shape = 'u8[4096]{0}', space=vmem, size = 0x1000, scoped, tag = 'output window, operand 0, single buffered']
    #allocation3 [shape = 's32[1]{0}', space=sflag, size = 0x4, scoped, tag = 'scoped memory for tpu_custom_call.1']
    %7 = vsyncpa [#allocation3], 0
    // Predicated region
    $region2: #{tpu_custom_call.1} parent=1 // pred_check
      _
    $region3: #{tpu_custom_call.1} parent=1 // pred_check_branch
      %9 = sbr.rel (0) target = $region5
    $region4: #{tpu_custom_call.1} parent=1 // pred_region
      _
    $region5: #{tpu_custom_call.1} parent=1 // pred_fallthru
      _
    // Predicated region
    $region6: #{tpu_custom_call.1} parent=1 // pred_check
      _
    $region7: #{tpu_custom_call.1} parent=1 // pred_check_branch
      %11 = sbr.rel (0) target = $region9
    $region8: #{tpu_custom_call.1} parent=1 // pred_region
      _
    $region9: #{tpu_custom_call.1} parent=1 // pred_fallthru
      _
    %v12 = vld [vmem:[%s0] sm:$0x1]
    %v13 = vld [vmem:[%s0 + $0x1] sm:$0x1]
    %v14 = vld [vmem:[%s0 + $0x2] sm:$0x1]
    %v15 = vld [vmem:[%s0 + $0x3] sm:$0x1]
    %v16 = vld [vmem:[%s0 + $0x4] sm:$0x1]
    %v17 = vld [vmem:[%s0 + $0x5] sm:$0x1]
    %v18 = vld [vmem:[%s0 + $0x6] sm:$0x1]
    %v19 = vld [vmem:[%s0 + $0x7] sm:$0x1]
    %v20 = vld [vmem:[%s1] sm:$0xff]
    %v21 = vld [vmem:[%s1 + $0x8] sm:$0x3]
    %v22 = vld [vmem:[%s1 + $0x10] sm:$0xff]
    %v23 = vld [vmem:[%s1 + $0x18] sm:$0x3]
    %v24 = vld [vmem:[%s1 + $0x20] sm:$0xff]
    %v25 = vld [vmem:[%s1 + $0x28] sm:$0x3]
    %v26 = vld [vmem:[%s1 + $0x30] sm:$0xff]
    %v27 = vld [vmem:[%s1 + $0x38] sm:$0x3]
    %v28 = vld [vmem:[%s1 + $0x40] sm:$0xff]
    %v29 = vld [vmem:[%s1 + $0x48] sm:$0x3]
    %v30 = vld [vmem:[%s1 + $0x50] sm:$0xff]
    %v31 = vld [vmem:[%s1 + $0x58] sm:$0x3]
    %v32 = vld [vmem:[%s1 + $0x60] sm:$0xff]
    %v33 = vld [vmem:[%s1 + $0x68] sm:$0x3]
    %v34 = vld [vmem:[%s1 + $0x70] sm:$0xff]
    %v35 = vld [vmem:[%s1 + $0x78] sm:$0x3]
    %vm36 = vcmask 80896
    %v38 = vsel %vm36, %v12, 0
    %vm40 = vcmask 1041408
    %v42 = vsel %vm40, %v21, 0
    %44 = vmatprep.subr.mxu0 0.0
    %45 = vmatpush1.msra.mxu0 %v20
    %46 = vmatprep.subr.mxu0 0.0
    %47 = vmatpush1.msra.mxu0 %v42
    %48 = vmatprep.subr.mxu0 0.0
    %49 = vmatpush1.msra.mxu0 0.0
    %50 = vmatprep.subr.mxu0 0.0
    %51 = vmatpush1.msra.mxu0 0.0
    %52 = vmatprep.subr.mxu0 0.0
    %53 = vmatpush1.msra.mxu0 0.0
    %54 = vmatprep.subr.mxu0 0.0
    %55 = vmatpush1.msra.mxu0 0.0
    %56 = vmatprep.subr.mxu0 0.0
    %57 = vmatpush1.msra.mxu0 0.0
    %58 = vmatprep.subr.mxu0 0.0
    %59 = vmatpush1.msra.mxu0 0.0
    %60 = vmatprep.subr.mxu0 0.0
    %61 = vmatpush1.msra.mxu0 0.0
    %62 = vmatprep.subr.mxu0 0.0
    %63 = vmatpush1.msra.mxu0 0.0
    %64 = vmatprep.subr.mxu0 0.0
    %65 = vmatpush1.msra.mxu0 0.0
    %66 = vmatprep.subr.mxu0 0.0
    %67 = vmatpush1.msra.mxu0 0.0
    %68 = vmatprep.subr.mxu0 0.0
    %69 = vmatpush1.msra.mxu0 0.0
    %70 = vmatprep.subr.mxu0 0.0
    %71 = vmatpush1.msra.mxu0 0.0
    %72 = vmatprep.subr.mxu0 0.0
    %73 = vmatpush1.msra.mxu0 0.0
    %74 = vmatprep.subr.mxu0 0.0
    %75 = vmatpush1.msra.mxu0 0.0
    %76 = vmatprep.subr.mxu0 0.0
    %77 = vmatpush1.msra.mxu0 0.0
    %78 = vmatprep.subr.mxu0 0.0
    %79 = vmatpush1.msra.mxu0 0.0
    %80 = vmatprep.subr.mxu0 0.0
    %81 = vmatpush1.msra.mxu0 0.0
    %82 = vmatprep.subr.mxu0 0.0
    %83 = vmatpush1.msra.mxu0 0.0
    %84 = vmatprep.subr.mxu0 0.0
    %85 = vmatpush1.msra.mxu0 0.0
    %86 = vmatprep.subr.mxu0 0.0
    %87 = vmatpush1.msra.mxu0 0.0
    %88 = vmatprep.subr.mxu0 0.0
    %89 = vmatpush1.msra.mxu0 0.0
    %90 = vmatprep.subr.mxu0 0.0
    %91 = vmatpush1.msra.mxu0 0.0
    %92 = vmatprep.subr.mxu0 0.0
    %93 = vmatpush1.msra.mxu0 0.0
    %94 = vmatprep.subr.mxu0 0.0
    %95 = vmatpush1.msra.mxu0 0.0
    %96 = vmatprep.subr.mxu0 0.0
    %97 = vmatpush1.msra.mxu0 0.0
    %98 = vmatprep.subr.mxu0 0.0
    %99 = vmatpush1.msra.mxu0 0.0
    %100 = vmatprep.subr.mxu0 0.0
    %101 = vmatpush1.msra.mxu0 0.0
    %102 = vmatprep.subr.mxu0 0.0
    %103 = vmatpush1.msra.mxu0 0.0
    %104 = vmatprep.subr.mxu0 0.0
    %105 = vmatpush1.msra.mxu0 0.0
    %106 = vmatprep.subr.mxu0 0.0
    %107 = vmatpush1.msra.mxu0 0.0
    %108 = vmatprep.mubr.f32.mxu0 0.0
    %109 = vmatmul.mubr.f32.gmra.mrb[0].mxu0 %v38
    %v110 = vpop.f32.mrb[0].mxu0
    %v111 = vadd.f32 0.0, %v110
    %v112 = vpop.f32.mrb[0].mxu0
    %113 = vdwg.mxu0
    %v115 = vsel %vm36, %v13, 0
    %v118 = vsel %vm40, %v23, 0
    %120 = vmatprep.subr.mxu0 0.0
    %121 = vmatpush1.msra.mxu0 %v22
    %122 = vmatprep.subr.mxu0 0.0
    %123 = vmatpush1.msra.mxu0 %v118
    %124 = vmatprep.subr.mxu0 0.0
    %125 = vmatpush1.msra.mxu0 0.0
    %126 = vmatprep.subr.mxu0 0.0
    %127 = vmatpush1.msra.mxu0 0.0
    %128 = vmatprep.subr.mxu0 0.0
    %129 = vmatpush1.msra.mxu0 0.0
    %130 = vmatprep.subr.mxu0 0.0
    %131 = vmatpush1.msra.mxu0 0.0
    %132 = vmatprep.subr.mxu0 0.0
    %133 = vmatpush1.msra.mxu0 0.0
    %134 = vmatprep.subr.mxu0 0.0
    %135 = vmatpush1.msra.mxu0 0.0
    %136 = vmatprep.subr.mxu0 0.0
    %137 = vmatpush1.msra.mxu0 0.0
    %138 = vmatprep.subr.mxu0 0.0
    %139 = vmatpush1.msra.mxu0 0.0
    %140 = vmatprep.subr.mxu0 0.0
    %141 = vmatpush1.msra.mxu0 0.0
    %142 = vmatprep.subr.mxu0 0.0
    %143 = vmatpush1.msra.mxu0 0.0
    %144 = vmatprep.subr.mxu0 0.0
    %145 = vmatpush1.msra.mxu0 0.0
    %146 = vmatprep.subr.mxu0 0.0
    %147 = vmatpush1.msra.mxu0 0.0
    %148 = vmatprep.subr.mxu0 0.0
    %149 = vmatpush1.msra.mxu0 0.0
    %150 = vmatprep.subr.mxu0 0.0
    %151 = vmatpush1.msra.mxu0 0.0
    %152 = vmatprep.subr.mxu0 0.0
    %153 = vmatpush1.msra.mxu0 0.0
    %154 = vmatprep.subr.mxu0 0.0
    %155 = vmatpush1.msra.mxu0 0.0
    %156 = vmatprep.subr.mxu0 0.0
    %157 = vmatpush1.msra.mxu0 0.0
    %158 = vmatprep.subr.mxu0 0.0
    %159 = vmatpush1.msra.mxu0 0.0
    %160 = vmatprep.subr.mxu0 0.0
    %161 = vmatpush1.msra.mxu0 0.0
    %162 = vmatprep.subr.mxu0 0.0
    %163 = vmatpush1.msra.mxu0 0.0
    %164 = vmatprep.subr.mxu0 0.0
    %165 = vmatpush1.msra.mxu0 0.0
    %166 = vmatprep.subr.mxu0 0.0
    %167 = vmatpush1.msra.mxu0 0.0
    %168 = vmatprep.subr.mxu0 0.0
    %169 = vmatpush1.msra.mxu0 0.0
    %170 = vmatprep.subr.mxu0 0.0
    %171 = vmatpush1.msra.mxu0 0.0
    %172 = vmatprep.subr.mxu0 0.0
    %173 = vmatpush1.msra.mxu0 0.0
    %174 = vmatprep.subr.mxu0 0.0
    %175 = vmatpush1.msra.mxu0 0.0
    %176 = vmatprep.subr.mxu0 0.0
    %177 = vmatpush1.msra.mxu0 0.0
    %178 = vmatprep.subr.mxu0 0.0
    %179 = vmatpush1.msra.mxu0 0.0
    %180 = vmatprep.subr.mxu0 0.0
    %181 = vmatpush1.msra.mxu0 0.0
    %182 = vmatprep.subr.mxu0 0.0
    %183 = vmatpush1.msra.mxu0 0.0
    %184 = vmatprep.mubr.f32.mxu0 0.0
    %185 = vmatmul.mubr.f32.gmra.mrb[0].mxu0 %v115
    %v186 = vpop.f32.mrb[0].mxu0
    %v187 = vadd.f32 0.0, %v186
    %v188 = vpop.f32.mrb[0].mxu0
    %189 = vdwg.mxu0
    %v191 = vsel %vm36, %v14, 0
    %v194 = vsel %vm40, %v25, 0
    %196 = vmatprep.subr.mxu0 0.0
    %197 = vmatpush1.msra.mxu0 %v24
    %198 = vmatprep.subr.mxu0 0.0
    %199 = vmatpush1.msra.mxu0 %v194
    %200 = vmatprep.subr.mxu0 0.0
    %201 = vmatpush1.msra.mxu0 0.0
    %202 = vmatprep.subr.mxu0 0.0
    %203 = vmatpush1.msra.mxu0 0.0
    %204 = vmatprep.subr.mxu0 0.0
    %205 = vmatpush1.msra.mxu0 0.0
    %206 = vmatprep.subr.mxu0 0.0
    %207 = vmatpush1.msra.mxu0 0.0
    %208 = vmatprep.subr.mxu0 0.0
    %209 = vmatpush1.msra.mxu0 0.0
    %210 = vmatprep.subr.mxu0 0.0
    %211 = vmatpush1.msra.mxu0 0.0
    %212 = vmatprep.subr.mxu0 0.0
    %213 = vmatpush1.msra.mxu0 0.0
    %214 = vmatprep.subr.mxu0 0.0
    %215 = vmatpush1.msra.mxu0 0.0
    %216 = vmatprep.subr.mxu0 0.0
    %217 = vmatpush1.msra.mxu0 0.0
    %218 = vmatprep.subr.mxu0 0.0
    %219 = vmatpush1.msra.mxu0 0.0
    %220 = vmatprep.subr.mxu0 0.0
    %221 = vmatpush1.msra.mxu0 0.0
    %222 = vmatprep.subr.mxu0 0.0
    %223 = vmatpush1.msra.mxu0 0.0
    %224 = vmatprep.subr.mxu0 0.0
    %225 = vmatpush1.msra.mxu0 0.0
    %226 = vmatprep.subr.mxu0 0.0
    %227 = vmatpush1.msra.mxu0 0.0
    %228 = vmatprep.subr.mxu0 0.0
    %229 = vmatpush1.msra.mxu0 0.0
    %230 = vmatprep.subr.mxu0 0.0
    %231 = vmatpush1.msra.mxu0 0.0
    %232 = vmatprep.subr.mxu0 0.0
    %233 = vmatpush1.msra.mxu0 0.0
    %234 = vmatprep.subr.mxu0 0.0
    %235 = vmatpush1.msra.mxu0 0.0
    %236 = vmatprep.subr.mxu0 0.0
    %237 = vmatpush1.msra.mxu0 0.0
    %238 = vmatprep.subr.mxu0 0.0
    %239 = vmatpush1.msra.mxu0 0.0
    %240 = vmatprep.subr.mxu0 0.0
    %241 = vmatpush1.msra.mxu0 0.0
    %242 = vmatprep.subr.mxu0 0.0
    %243 = vmatpush1.msra.mxu0 0.0
    %244 = vmatprep.subr.mxu0 0.0
    %245 = vmatpush1.msra.mxu0 0.0
    %246 = vmatprep.subr.mxu0 0.0
    %247 = vmatpush1.msra.mxu0 0.0
    %248 = vmatprep.subr.mxu0 0.0
    %249 = vmatpush1.msra.mxu0 0.0
    %250 = vmatprep.subr.mxu0 0.0
    %251 = vmatpush1.msra.mxu0 0.0
    %252 = vmatprep.subr.mxu0 0.0
    %253 = vmatpush1.msra.mxu0 0.0
    %254 = vmatprep.subr.mxu0 0.0
    %255 = vmatpush1.msra.mxu0 0.0
    %256 = vmatprep.subr.mxu0 0.0
    %257 = vmatpush1.msra.mxu0 0.0
    %258 = vmatprep.subr.mxu0 0.0
    %259 = vmatpush1.msra.mxu0 0.0
    %260 = vmatprep.mubr.f32.mxu0 0.0
    %261 = vmatmul.mubr.f32.gmra.mrb[0].mxu0 %v191
    %v262 = vpop.f32.mrb[0].mxu0
    %v263 = vadd.f32 0.0, %v262
    %v264 = vpop.f32.mrb[0].mxu0
    %265 = vdwg.mxu0
    %v267 = vsel %vm36, %v15, 0
    %v270 = vsel %vm40, %v27, 0
    %272 = vmatprep.subr.mxu0 0.0
    %273 = vmatpush1.msra.mxu0 %v26
    %274 = vmatprep.subr.mxu0 0.0
    %275 = vmatpush1.msra.mxu0 %v270
    %276 = vmatprep.subr.mxu0 0.0
    %277 = vmatpush1.msra.mxu0 0.0
    %278 = vmatprep.subr.mxu0 0.0
    %279 = vmatpush1.msra.mxu0 0.0
    %280 = vmatprep.subr.mxu0 0.0
    %281 = vmatpush1.msra.mxu0 0.0
    %282 = vmatprep.subr.mxu0 0.0
    %283 = vmatpush1.msra.mxu0 0.0
    %284 = vmatprep.subr.mxu0 0.0
    %285 = vmatpush1.msra.mxu0 0.0
    %286 = vmatprep.subr.mxu0 0.0
    %287 = vmatpush1.msra.mxu0 0.0
    %288 = vmatprep.subr.mxu0 0.0
    %289 = vmatpush1.msra.mxu0 0.0
    %290 = vmatprep.subr.mxu0 0.0
    %291 = vmatpush1.msra.mxu0 0.0
    %292 = vmatprep.subr.mxu0 0.0
    %293 = vmatpush1.msra.mxu0 0.0
    %294 = vmatprep.subr.mxu0 0.0
    %295 = vmatpush1.msra.mxu0 0.0
    %296 = vmatprep.subr.mxu0 0.0
    %297 = vmatpush1.msra.mxu0 0.0
    %298 = vmatprep.subr.mxu0 0.0
    %299 = vmatpush1.msra.mxu0 0.0
    %300 = vmatprep.subr.mxu0 0.0
    %301 = vmatpush1.msra.mxu0 0.0
    %302 = vmatprep.subr.mxu0 0.0
    %303 = vmatpush1.msra.mxu0 0.0
    %304 = vmatprep.subr.mxu0 0.0
    %305 = vmatpush1.msra.mxu0 0.0
    %306 = vmatprep.subr.mxu0 0.0
    %307 = vmatpush1.msra.mxu0 0.0
    %308 = vmatprep.subr.mxu0 0.0
    %309 = vmatpush1.msra.mxu0 0.0
    %310 = vmatprep.subr.mxu0 0.0
    %311 = vmatpush1.msra.mxu0 0.0
    %312 = vmatprep.subr.mxu0 0.0
    %313 = vmatpush1.msra.mxu0 0.0
    %314 = vmatprep.subr.mxu0 0.0
    %315 = vmatpush1.msra.mxu0 0.0
    %316 = vmatprep.subr.mxu0 0.0
    %317 = vmatpush1.msra.mxu0 0.0
    %318 = vmatprep.subr.mxu0 0.0
    %319 = vmatpush1.msra.mxu0 0.0
    %320 = vmatprep.subr.mxu0 0.0
    %321 = vmatpush1.msra.mxu0 0.0
    %322 = vmatprep.subr.mxu0 0.0
    %323 = vmatpush1.msra.mxu0 0.0
    %324 = vmatprep.subr.mxu0 0.0
    %325 = vmatpush1.msra.mxu0 0.0
    %326 = vmatprep.subr.mxu0 0.0
    %327 = vmatpush1.msra.mxu0 0.0
    %328 = vmatprep.subr.mxu0 0.0
    %329 = vmatpush1.msra.mxu0 0.0
    %330 = vmatprep.subr.mxu0 0.0
    %331 = vmatpush1.msra.mxu0 0.0
    %332 = vmatprep.subr.mxu0 0.0
    %333 = vmatpush1.msra.mxu0 0.0
    %334 = vmatprep.subr.mxu0 0.0
    %335 = vmatpush1.msra.mxu0 0.0
    %336 = vmatprep.mubr.f32.mxu0 0.0
    %337 = vmatmul.mubr.f32.gmra.mrb[0].mxu0 %v267
    %v338 = vpop.f32.mrb[0].mxu0
    %v339 = vadd.f32 0.0, %v338
    %v340 = vpop.f32.mrb[0].mxu0
    %341 = vdwg.mxu0
    %v343 = vsel %vm36, %v16, 0
    %v346 = vsel %vm40, %v29, 0
    %348 = vmatprep.subr.mxu0 0.0
    %349 = vmatpush1.msra.mxu0 %v28
    %350 = vmatprep.subr.mxu0 0.0
    %351 = vmatpush1.msra.mxu0 %v346
    %352 = vmatprep.subr.mxu0 0.0
    %353 = vmatpush1.msra.mxu0 0.0
    %354 = vmatprep.subr.mxu0 0.0
    %355 = vmatpush1.msra.mxu0 0.0
    %356 = vmatprep.subr.mxu0 0.0
    %357 = vmatpush1.msra.mxu0 0.0
    %358 = vmatprep.subr.mxu0 0.0
    %359 = vmatpush1.msra.mxu0 0.0
    %360 = vmatprep.subr.mxu0 0.0
    %361 = vmatpush1.msra.mxu0 0.0
    %362 = vmatprep.subr.mxu0 0.0
    %363 = vmatpush1.msra.mxu0 0.0
    %364 = vmatprep.subr.mxu0 0.0
    %365 = vmatpush1.msra.mxu0 0.0
    %366 = vmatprep.subr.mxu0 0.0
    %367 = vmatpush1.msra.mxu0 0.0
    %368 = vmatprep.subr.mxu0 0.0
    %369 = vmatpush1.msra.mxu0 0.0
    %370 = vmatprep.subr.mxu0 0.0
    %371 = vmatpush1.msra.mxu0 0.0
    %372 = vmatprep.subr.mxu0 0.0
    %373 = vmatpush1.msra.mxu0 0.0
    %374 = vmatprep.subr.mxu0 0.0
    %375 = vmatpush1.msra.mxu0 0.0
    %376 = vmatprep.subr.mxu0 0.0
    %377 = vmatpush1.msra.mxu0 0.0
    %378 = vmatprep.subr.mxu0 0.0
    %379 = vmatpush1.msra.mxu0 0.0
    %380 = vmatprep.subr.mxu0 0.0
    %381 = vmatpush1.msra.mxu0 0.0
    %382 = vmatprep.subr.mxu0 0.0
    %383 = vmatpush1.msra.mxu0 0.0
    %384 = vmatprep.subr.mxu0 0.0
    %385 = vmatpush1.msra.mxu0 0.0
    %386 = vmatprep.subr.mxu0 0.0
    %387 = vmatpush1.msra.mxu0 0.0
    %388 = vmatprep.subr.mxu0 0.0
    %389 = vmatpush1.msra.mxu0 0.0
    %390 = vmatprep.subr.mxu0 0.0
    %391 = vmatpush1.msra.mxu0 0.0
    %392 = vmatprep.subr.mxu0 0.0
    %393 = vmatpush1.msra.mxu0 0.0
    %394 = vmatprep.subr.mxu0 0.0
    %395 = vmatpush1.msra.mxu0 0.0
    %396 = vmatprep.subr.mxu0 0.0
    %397 = vmatpush1.msra.mxu0 0.0
    %398 = vmatprep.subr.mxu0 0.0
    %399 = vmatpush1.msra.mxu0 0.0
    %400 = vmatprep.subr.mxu0 0.0
    %401 = vmatpush1.msra.mxu0 0.0
    %402 = vmatprep.subr.mxu0 0.0
    %403 = vmatpush1.msra.mxu0 0.0
    %404 = vmatprep.subr.mxu0 0.0
    %405 = vmatpush1.msra.mxu0 0.0
    %406 = vmatprep.subr.mxu0 0.0
    %407 = vmatpush1.msra.mxu0 0.0
    %408 = vmatprep.subr.mxu0 0.0
    %409 = vmatpush1.msra.mxu0 0.0
    %410 = vmatprep.subr.mxu0 0.0
    %411 = vmatpush1.msra.mxu0 0.0
    %412 = vmatprep.mubr.f32.mxu0 0.0
    %413 = vmatmul.mubr.f32.gmra.mrb[0].mxu0 %v343
    %v414 = vpop.f32.mrb[0].mxu0
    %v415 = vadd.f32 0.0, %v414
    %v416 = vpop.f32.mrb[0].mxu0
    %417 = vdwg.mxu0
    %v419 = vsel %vm36, %v17, 0
    %v422 = vsel %vm40, %v31, 0
    %424 = vmatprep.subr.mxu0 0.0
    %425 = vmatpush1.msra.mxu0 %v30
    %426 = vmatprep.subr.mxu0 0.0
    %427 = vmatpush1.msra.mxu0 %v422
    %428 = vmatprep.subr.mxu0 0.0
    %429 = vmatpush1.msra.mxu0 0.0
    %430 = vmatprep.subr.mxu0 0.0
    %431 = vmatpush1.msra.mxu0 0.0
    %432 = vmatprep.subr.mxu0 0.0
    %433 = vmatpush1.msra.mxu0 0.0
    %434 = vmatprep.subr.mxu0 0.0
    %435 = vmatpush1.msra.mxu0 0.0
    %436 = vmatprep.subr.mxu0 0.0
    %437 = vmatpush1.msra.mxu0 0.0
    %438 = vmatprep.subr.mxu0 0.0
    %439 = vmatpush1.msra.mxu0 0.0
    %440 = vmatprep.subr.mxu0 0.0
    %441 = vmatpush1.msra.mxu0 0.0
    %442 = vmatprep.subr.mxu0 0.0
    %443 = vmatpush1.msra.mxu0 0.0
    %444 = vmatprep.subr.mxu0 0.0
    %445 = vmatpush1.msra.mxu0 0.0
    %446 = vmatprep.subr.mxu0 0.0
    %447 = vmatpush1.msra.mxu0 0.0
    %448 = vmatprep.subr.mxu0 0.0
    %449 = vmatpush1.msra.mxu0 0.0
    %450 = vmatprep.subr.mxu0 0.0
    %451 = vmatpush1.msra.mxu0 0.0
    %452 = vmatprep.subr.mxu0 0.0
    %453 = vmatpush1.msra.mxu0 0.0
    %454 = vmatprep.subr.mxu0 0.0
    %455 = vmatpush1.msra.mxu0 0.0
    %456 = vmatprep.subr.mxu0 0.0
    %457 = vmatpush1.msra.mxu0 0.0
    %458 = vmatprep.subr.mxu0 0.0
    %459 = vmatpush1.msra.mxu0 0.0
    %460 = vmatprep.subr.mxu0 0.0
    %461 = vmatpush1.msra.mxu0 0.0
    %462 = vmatprep.subr.mxu0 0.0
    %463 = vmatpush1.msra.mxu0 0.0
    %464 = vmatprep.subr.mxu0 0.0
    %465 = vmatpush1.msra.mxu0 0.0
    %466 = vmatprep.subr.mxu0 0.0
    %467 = vmatpush1.msra.mxu0 0.0
    %468 = vmatprep.subr.mxu0 0.0
    %469 = vmatpush1.msra.mxu0 0.0
    %470 = vmatprep.subr.mxu0 0.0
    %471 = vmatpush1.msra.mxu0 0.0
    %472 = vmatprep.subr.mxu0 0.0
    %473 = vmatpush1.msra.mxu0 0.0
    %474 = vmatprep.subr.mxu0 0.0
    %475 = vmatpush1.msra.mxu0 0.0
    %476 = vmatprep.subr.mxu0 0.0
    %477 = vmatpush1.msra.mxu0 0.0
    %478 = vmatprep.subr.mxu0 0.0
    %479 = vmatpush1.msra.mxu0 0.0
    %480 = vmatprep.subr.mxu0 0.0
    %481 = vmatpush1.msra.mxu0 0.0
    %482 = vmatprep.subr.mxu0 0.0
    %483 = vmatpush1.msra.mxu0 0.0
    %484 = vmatprep.subr.mxu0 0.0
    %485 = vmatpush1.msra.mxu0 0.0
    %486 = vmatprep.subr.mxu0 0.0
    %487 = vmatpush1.msra.mxu0 0.0
    %488 = vmatprep.mubr.f32.mxu0 0.0
    %489 = vmatmul.mubr.f32.gmra.mrb[0].mxu0 %v419
    %v490 = vpop.f32.mrb[0].mxu0
    %v491 = vadd.f32 0.0, %v490
    %v492 = vpop.f32.mrb[0].mxu0
    %493 = vdwg.mxu0
    %v495 = vsel %vm36, %v18, 0
    %v498 = vsel %vm40, %v33, 0
    %500 = vmatprep.subr.mxu0 0.0
    %501 = vmatpush1.msra.mxu0 %v32
    %502 = vmatprep.subr.mxu0 0.0
    %503 = vmatpush1.msra.mxu0 %v498
    %504 = vmatprep.subr.mxu0 0.0
    %505 = vmatpush1.msra.mxu0 0.0
    %506 = vmatprep.subr.mxu0 0.0
    %507 = vmatpush1.msra.mxu0 0.0
    %508 = vmatprep.subr.mxu0 0.0
    %509 = vmatpush1.msra.mxu0 0.0
    %510 = vmatprep.subr.mxu0 0.0
    %511 = vmatpush1.msra.mxu0 0.0
    %512 = vmatprep.subr.mxu0 0.0
    %513 = vmatpush1.msra.mxu0 0.0
    %514 = vmatprep.subr.mxu0 0.0
    %515 = vmatpush1.msra.mxu0 0.0
    %516 = vmatprep.subr.mxu0 0.0
    %517 = vmatpush1.msra.mxu0 0.0
    %518 = vmatprep.subr.mxu0 0.0
    %519 = vmatpush1.msra.mxu0 0.0
    %520 = vmatprep.subr.mxu0 0.0
    %521 = vmatpush1.msra.mxu0 0.0
    %522 = vmatprep.subr.mxu0 0.0
    %523 = vmatpush1.msra.mxu0 0.0
    %524 = vmatprep.subr.mxu0 0.0
    %525 = vmatpush1.msra.mxu0 0.0
    %526 = vmatprep.subr.mxu0 0.0
    %527 = vmatpush1.msra.mxu0 0.0
    %528 = vmatprep.subr.mxu0 0.0
    %529 = vmatpush1.msra.mxu0 0.0
    %530 = vmatprep.subr.mxu0 0.0
    %531 = vmatpush1.msra.mxu0 0.0
    %532 = vmatprep.subr.mxu0 0.0
    %533 = vmatpush1.msra.mxu0 0.0
    %534 = vmatprep.subr.mxu0 0.0
    %535 = vmatpush1.msra.mxu0 0.0
    %536 = vmatprep.subr.mxu0 0.0
    %537 = vmatpush1.msra.mxu0 0.0
    %538 = vmatprep.subr.mxu0 0.0
    %539 = vmatpush1.msra.mxu0 0.0
    %540 = vmatprep.subr.mxu0 0.0
    %541 = vmatpush1.msra.mxu0 0.0
    %542 = vmatprep.subr.mxu0 0.0
    %543 = vmatpush1.msra.mxu0 0.0
    %544 = vmatprep.subr.mxu0 0.0
    %545 = vmatpush1.msra.mxu0 0.0
    %546 = vmatprep.subr.mxu0 0.0
    %547 = vmatpush1.msra.mxu0 0.0
    %548 = vmatprep.subr.mxu0 0.0
    %549 = vmatpush1.msra.mxu0 0.0
    %550 = vmatprep.subr.mxu0 0.0
    %551 = vmatpush1.msra.mxu0 0.0
    %552 = vmatprep.subr.mxu0 0.0
    %553 = vmatpush1.msra.mxu0 0.0
    %554 = vmatprep.subr.mxu0 0.0
    %555 = vmatpush1.msra.mxu0 0.0
    %556 = vmatprep.subr.mxu0 0.0
    %557 = vmatpush1.msra.mxu0 0.0
    %558 = vmatprep.subr.mxu0 0.0
    %559 = vmatpush1.msra.mxu0 0.0
    %560 = vmatprep.subr.mxu0 0.0
    %561 = vmatpush1.msra.mxu0 0.0
    %562 = vmatprep.subr.mxu0 0.0
    %563 = vmatpush1.msra.mxu0 0.0
    %564 = vmatprep.mubr.f32.mxu0 0.0
    %565 = vmatmul.mubr.f32.gmra.mrb[0].mxu0 %v495
    %v566 = vpop.f32.mrb[0].mxu0
    %v567 = vadd.f32 0.0, %v566
    %v568 = vpop.f32.mrb[0].mxu0
    %569 = vdwg.mxu0
    %v571 = vsel %vm36, %v19, 0
    %v574 = vsel %vm40, %v35, 0
    %576 = vmatprep.subr.mxu0 0.0
    %577 = vmatpush1.msra.mxu0 %v34
    %578 = vmatprep.subr.mxu0 0.0
    %579 = vmatpush1.msra.mxu0 %v574
    %580 = vmatprep.subr.mxu0 0.0
    %581 = vmatpush1.msra.mxu0 0.0
    %582 = vmatprep.subr.mxu0 0.0
    %583 = vmatpush1.msra.mxu0 0.0
    %584 = vmatprep.subr.mxu0 0.0
    %585 = vmatpush1.msra.mxu0 0.0
    %586 = vmatprep.subr.mxu0 0.0
    %587 = vmatpush1.msra.mxu0 0.0
    %588 = vmatprep.subr.mxu0 0.0
    %589 = vmatpush1.msra.mxu0 0.0
    %590 = vmatprep.subr.mxu0 0.0
    %591 = vmatpush1.msra.mxu0 0.0
    %592 = vmatprep.subr.mxu0 0.0
    %593 = vmatpush1.msra.mxu0 0.0
    %594 = vmatprep.subr.mxu0 0.0
    %595 = vmatpush1.msra.mxu0 0.0
    %596 = vmatprep.subr.mxu0 0.0
    %597 = vmatpush1.msra.mxu0 0.0
    %598 = vmatprep.subr.mxu0 0.0
    %599 = vmatpush1.msra.mxu0 0.0
    %600 = vmatprep.subr.mxu0 0.0
    %601 = vmatpush1.msra.mxu0 0.0
    %602 = vmatprep.subr.mxu0 0.0
    %603 = vmatpush1.msra.mxu0 0.0
    %604 = vmatprep.subr.mxu0 0.0
    %605 = vmatpush1.msra.mxu0 0.0
    %606 = vmatprep.subr.mxu0 0.0
    %607 = vmatpush1.msra.mxu0 0.0
    %608 = vmatprep.subr.mxu0 0.0
    %609 = vmatpush1.msra.mxu0 0.0
    %610 = vmatprep.subr.mxu0 0.0
    %611 = vmatpush1.msra.mxu0 0.0
    %612 = vmatprep.subr.mxu0 0.0
    %613 = vmatpush1.msra.mxu0 0.0
    %614 = vmatprep.subr.mxu0 0.0
    %615 = vmatpush1.msra.mxu0 0.0
    %616 = vmatprep.subr.mxu0 0.0
    %617 = vmatpush1.msra.mxu0 0.0
    %618 = vmatprep.subr.mxu0 0.0
    %619 = vmatpush1.msra.mxu0 0.0
    %620 = vmatprep.subr.mxu0 0.0
    %621 = vmatpush1.msra.mxu0 0.0
    %622 = vmatprep.subr.mxu0 0.0
    %623 = vmatpush1.msra.mxu0 0.0
    %624 = vmatprep.subr.mxu0 0.0
    %625 = vmatpush1.msra.mxu0 0.0
    %626 = vmatprep.subr.mxu0 0.0
    %627 = vmatpush1.msra.mxu0 0.0
    %628 = vmatprep.subr.mxu0 0.0
    %629 = vmatpush1.msra.mxu0 0.0
    %630 = vmatprep.subr.mxu0 0.0
    %631 = vmatpush1.msra.mxu0 0.0
    %632 = vmatprep.subr.mxu0 0.0
    %633 = vmatpush1.msra.mxu0 0.0
    %634 = vmatprep.subr.mxu0 0.0
    %635 = vmatpush1.msra.mxu0 0.0
    %636 = vmatprep.subr.mxu0 0.0
    %637 = vmatpush1.msra.mxu0 0.0
    %638 = vmatprep.subr.mxu0 0.0
    %639 = vmatpush1.msra.mxu0 0.0
    %640 = vmatprep.mubr.f32.mxu0 0.0
    %641 = vmatmul.mubr.f32.gmra.mrb[0].mxu0 %v571
    %v642 = vpop.f32.mrb[0].mxu0
    %v643 = vadd.f32 0.0, %v642
    %v644 = vpop.f32.mrb[0].mxu0
    %645 = vdwg.mxu0
    %v654 = vrot.slane %v187, 7
    %vm655 = vcmask 1041409
    %v656 = vsel %vm655, %v654, %v111
    %v657 = vrot.slane %v263, 6
    %vm658 = vcmask 1042434
    %v659 = vsel %vm658, %v657, %v656
    %v660 = vrot.slane %v339, 5
    %vm661 = vcmask 1043459
    %v662 = vsel %vm661, %v660, %v659
    %v663 = vrot.slane %v415, 4
    %vm664 = vcmask 1044484
    %v665 = vsel %vm664, %v663, %v662
    %v666 = vrot.slane %v491, 3
    %vm667 = vcmask 1045509
    %v668 = vsel %vm667, %v666, %v665
    %v669 = vrot.slane %v567, 2
    %vm670 = vcmask 1046534
    %v671 = vsel %vm670, %v669, %v668
    %v672 = vrot.slane %v643, 1
    %vm673 = vcmask 1047559
    %v674 = vsel %vm673, %v672, %v671
    %vm676 = vcmask 261120
    %677 = vst.msk [vmem:[#allocation2] sm:$0xff] %vm676, %v674
    // Predicated region
    $region10: #{tpu_custom_call.1} parent=1 // pred_check
      _
    $region11: #{tpu_custom_call.1} parent=1 // pred_check_branch
      %679 = sbr.rel (0) target = $region13
    $region12: #{tpu_custom_call.1} parent=1 // pred_region
      %s681 = ssub.s32 128, 128
      %682 = vsyncadd [#allocation3], %s681
      %s684 = sshll.u32 [#allocation2], 4
      %s685 = int_to_ptr.vmem [resolvable:$true] %s684
      %687 = dma.vmem_to_hbm [thread:$0]  %s685, 128, %s2, [#allocation3]
    $region13: #{tpu_custom_call.1} parent=1 // pred_fallthru
      _
    // Predicated region
    $region14: #{tpu_custom_call.1} parent=1 // pred_check
      _
    $region15: #{tpu_custom_call.1} parent=1 // pred_check_branch
      %689 = sbr.rel (0) target = $region17
    $region16: #{tpu_custom_call.1} parent=1 // pred_region
      %690 = dma.done [#allocation3], 128
    $region17: #{tpu_custom_call.1} parent=1 // pred_fallthru
      _
    %691 = vsyncpa [#allocation3], 1

</llo_original>
